<compile_context>
chip_gen: v7x
topology: tpu7x:2x2x1
jax: 0.10.0
libtpu: 0.0.40
codegen_flags: <defaults>
</compile_context>

<pallas_src>
import math

import jax
import jax.numpy as jnp
from jax.experimental import pallas as pl
from jax.experimental.pallas import tpu as pltpu


_SQRT_2_OVER_PI = math.sqrt(2.0 / math.pi)


def _gelu_new(x):
    # GPT-2 "gelu_new" (tanh approximation), matches HF ACT2FN["gelu_new"].
    return 0.5 * x * (1.0 + jnp.tanh(_SQRT_2_OVER_PI * (x + 0.044715 * x * x * x)))


def _round_up(x, m):
    return ((x + m - 1) // m) * m


def _tpu_defaults():
    """Per-generation (tm target, VMEM working-set budget, vmem_limit cap)."""
    try:
        kind = jax.devices()[0].device_kind.lower()
    except Exception:
        kind = ""
    if "v7" in kind:
        # 64 MiB physical VMEM / TC -> keep real headroom; knee ~310 FLOPs/B.
        return 512, 40 * 1024 * 1024, 56 * 1024 * 1024
    if "v6" in kind:
        # 128 MiB VMEM; knee ~700 FLOPs/B -> big M tiles / weight residency.
        return 1024, 88 * 1024 * 1024, 110 * 1024 * 1024
    if "v5" in kind:
        # 128 MiB VMEM; knee ~240 FLOPs/B.
        return 512, 88 * 1024 * 1024, 110 * 1024 * 1024
    # Unknown backend: conservative.
    return 512, 48 * 1024 * 1024, 64 * 1024 * 1024


def _mode_a_bytes(tm, Hp, Ip, w_bytes, x_bytes):
    """VMEM footprint estimate for the weight-resident path."""
    x = 2 * tm * Hp * x_bytes            # double-buffered input tile
    out = 2 * tm * Hp * x_bytes          # double-buffered output tile
    w = 2 * (Hp * Ip + Ip * Hp) * w_bytes  # both weights (count 2 buffers)
    bias = 2 * (Ip + Hp) * w_bytes
    h_tmp = tm * Ip * 4                  # f32 intermediate activation
    return x + out + w + bias + h_tmp


def _mode_b_bytes(tm, Hp, ti, w_bytes, x_bytes):
    """VMEM footprint estimate for the I-tiled path."""
    x = 2 * tm * Hp * x_bytes
    out = 2 * tm * Hp * x_bytes
    w = 2 * (Hp * ti + ti * Hp) * w_bytes
    bias = 2 * (ti + Hp) * w_bytes
    acc = tm * Hp * 4                    # resident f32 accumulator
    h_tmp = tm * ti * 4                  # f32 intermediate activation slab
    return x + out + w + bias + acc + h_tmp


# ----------------------------------------------------------------------------
# Kernels
# ----------------------------------------------------------------------------

def gpt2_mlp_kernel_resident(x_ref, wfc_ref, bfc_ref, wproj_ref, bproj_ref, o_ref):
    # Whole weight set is VMEM-resident; one grid step per M tile.
    h = jnp.dot(x_ref[...], wfc_ref[...], preferred_element_type=jnp.float32)
    h = h + bfc_ref[...].astype(jnp.float32)
    h = _gelu_new(h)                                   # tanh -> EUP slot
    out = jnp.dot(h.astype(wproj_ref.dtype), wproj_ref[...],
                  preferred_element_type=jnp.float32)
    out = out + bproj_ref[...].astype(jnp.float32)
    # dropout(resid_pdrop): identity at inference (eval mode) -> no-op.
    o_ref[...] = out.astype(o_ref.dtype)


def gpt2_mlp_kernel_tiled(x_ref, wfc_ref, bfc_ref, wproj_ref, bproj_ref, o_ref,
                          acc_ref):
    # x_ref:     (tm, Hp)   native dtype
    # wfc_ref:   (Hp, ti)   native dtype
    # bfc_ref:   (1, ti)
    # wproj_ref: (ti, Hp)   native dtype
    # bproj_ref: (1, Hp)
    # o_ref:     (tm, Hp)
    # acc_ref:   (tm, Hp) f32, resident across the I (k) grid axis
    k = pl.program_id(1)

    @pl.when(k == 0)
    def _():
        acc_ref[...] = jnp.zeros_like(acc_ref)

    h = jnp.dot(x_ref[...], wfc_ref[...], preferred_element_type=jnp.float32)
    h = h + bfc_ref[...].astype(jnp.float32)
    h = _gelu_new(h)

    acc_ref[...] += jnp.dot(h.astype(wproj_ref.dtype), wproj_ref[...],
                            preferred_element_type=jnp.float32)

    @pl.when(k == pl.num_programs(1) - 1)
    def _():
        out = acc_ref[...] + bproj_ref[...].astype(jnp.float32)
        # dropout(resid_pdrop): identity at inference (eval mode) -> no-op.
        o_ref[...] = out.astype(o_ref.dtype)


# ----------------------------------------------------------------------------
# Wrapper
# ----------------------------------------------------------------------------

def gpt2_mlp(hidden_states, w_fc, b_fc, w_proj, b_proj, *,
             tm=None, ti=None, weight_resident=None, vmem_limit_bytes=None):
    """hidden_states: [B, S, H]; Conv1D weights are (in, out). Returns [B, S, H]."""
    B, S, H = hidden_states.shape
    Hf, I = w_fc.shape
    assert Hf == H and w_proj.shape == (I, H)
    assert b_fc.shape == (I,) and b_proj.shape == (H,)
    M = B * S

    tm_target, vmem_budget, vmem_cap = _tpu_defaults()
    if tm is None:
        tm = tm_target
    if ti is None:
        ti = 1024

    in_dtype = hidden_states.dtype
    x_bytes = jnp.dtype(in_dtype).itemsize
    w_bytes = jnp.dtype(w_fc.dtype).itemsize
    sub = max(8, 32 // x_bytes)          # sublane multiple: f32->8, bf16->16

    # ---- M tiling: big tiles for weight-traffic amortization, small padding.
    if M <= tm:
        tm = _round_up(M, sub)
    else:
        n_tiles = -(-M // tm)
        tm = _round_up(-(-M // n_tiles), sub)
    Mp = _round_up(M, tm)

    # ---- Lane padding of the hidden dim (GPT2-XL H=1600 -> 1664).
    Hp = _round_up(H, 128)
    Ip_full = _round_up(I, 128)

    # ---- Mode selection: weight residency if the full weight set fits VMEM.
    if weight_resident is None:
        weight_resident = (_mode_a_bytes(tm, Hp, Ip_full, w_bytes, x_bytes)
                           <= vmem_budget)

    if weight_resident:
        Ip = Ip_full
    else:
        ti = min(_round_up(ti, 128), Ip_full)
        # Shrink ti, then tm, until the working set fits the VMEM budget.
        while _mode_b_bytes(tm, Hp, ti, w_bytes, x_bytes) > vmem_budget and ti > 128:
            ti = max(128, _round_up(ti // 2, 128))
        while _mode_b_bytes(tm, Hp, ti, w_bytes, x_bytes) > vmem_budget and tm > sub:
            tm = max(sub, _round_up(tm // 2, sub))
            Mp = _round_up(M, tm)
        Ip = _round_up(I, ti)

    # ---- Zero padding (exact: gelu_new(0)=0, padded weight rows/cols are 0).
    x2d = hidden_states.reshape(M, H)
    x2d = jnp.pad(x2d, ((0, Mp - M), (0, Hp - H)))
    w_fc = jnp.pad(w_fc, ((0, Hp - H), (0, Ip - I)))
    b_fc = jnp.pad(b_fc, ((0, Ip - I),))
    w_proj = jnp.pad(w_proj, ((0, Ip - I), (0, Hp - H)))
    b_proj = jnp.pad(b_proj, ((0, Hp - H),))
    b_fc2 = b_fc.reshape(1, Ip)
    b_proj2 = b_proj.reshape(1, Hp)

    # ---- Advisory cost + VMEM limit with headroom (never the full 64 MiB v7x).
    n_m_tiles = Mp // tm
    weight_read_bytes = 2 * Hp * Ip * w_bytes
    if not weight_resident:
        weight_read_bytes *= n_m_tiles          # weights re-streamed per M tile
    cost = pl.CostEstimate(
        flops=4 * M * H * I,
        transcendentals=M * I,
        bytes_accessed=int(weight_read_bytes + 2 * Mp * Hp * x_bytes),
    )
    footprint = (_mode_a_bytes(tm, Hp, Ip, w_bytes, x_bytes) if weight_resident
                 else _mode_b_bytes(tm, Hp, ti, w_bytes, x_bytes))
    if vmem_limit_bytes is None:
        vmem_limit_bytes = min(vmem_cap,
                               max(32 * 1024 * 1024,
                                   int(footprint * 1.25) + (2 << 20)))

    if weight_resident:
        # TODO(synk): small-M on v7x uses one TensorCore (Mp//tm may be 1);
        # a split-I two-core path could recover ~2x for decode-like shapes.
        out2d = pl.pallas_call(
            gpt2_mlp_kernel_resident,
            out_shape=jax.ShapeDtypeStruct((Mp, Hp), in_dtype),
            grid_spec=pltpu.PrefetchScalarGridSpec(
                num_scalar_prefetch=0,
                grid=(Mp // tm,),
                in_specs=[
                    pl.BlockSpec((tm, Hp), lambda i: (i, 0)),   # x tile
                    pl.BlockSpec((Hp, Ip), lambda i: (0, 0)),   # W_fc (resident)
                    pl.BlockSpec((1, Ip), lambda i: (0, 0)),    # b_fc
                    pl.BlockSpec((Ip, Hp), lambda i: (0, 0)),   # W_proj (resident)
                    pl.BlockSpec((1, Hp), lambda i: (0, 0)),    # b_proj
                ],
                out_specs=pl.BlockSpec((tm, Hp), lambda i: (i, 0)),
            ),
            compiler_params=pltpu.CompilerParams(
                dimension_semantics=("parallel",),
                vmem_limit_bytes=vmem_limit_bytes,
            ),
            cost_estimate=cost,
        )(x2d, w_fc, b_fc2, w_proj, b_proj2)
    else:
        out2d = pl.pallas_call(
            gpt2_mlp_kernel_tiled,
            out_shape=jax.ShapeDtypeStruct((Mp, Hp), in_dtype),
            grid_spec=pltpu.PrefetchScalarGridSpec(
                num_scalar_prefetch=0,
                grid=(Mp // tm, Ip // ti),           # reduction (I) axis last
                in_specs=[
                    pl.BlockSpec((tm, Hp), lambda i, k: (i, 0)),  # x tile
                    pl.BlockSpec((Hp, ti), lambda i, k: (0, k)),  # W_fc slab
                    pl.BlockSpec((1, ti), lambda i, k: (0, k)),   # b_fc slab
                    pl.BlockSpec((ti, Hp), lambda i, k: (k, 0)),  # W_proj slab
                    pl.BlockSpec((1, Hp), lambda i, k: (0, 0)),   # b_proj
                ],
                out_specs=pl.BlockSpec((tm, Hp), lambda i, k: (i, 0)),
                scratch_shapes=[pltpu.VMEM((tm, Hp), jnp.float32)],
            ),
            compiler_params=pltpu.CompilerParams(
                dimension_semantics=("parallel", "arbitrary"),
                vmem_limit_bytes=vmem_limit_bytes,
            ),
            cost_estimate=cost,
        )(x2d, w_fc, b_fc2, w_proj, b_proj2)

    return out2d[:M, :H].reshape(B, S, H)


def gpt2_mlp_ref(hidden_states, w_fc, b_fc, w_proj, b_proj):
    """Pure-JAX reference (matches HF GPT2MLP.forward in eval mode)."""
    h = hidden_states @ w_fc + b_fc
    h = _gelu_new(h)
    h = h @ w_proj + b_proj
    return h


if __name__ == "__main__":
    # Small shapes consistent with GPT2MLP: hidden = 128, intermediate = 4*H.
    B, S, H = 2, 8, 128
    I = 4 * H

    key = jax.random.PRNGKey(0)
    kx, kwf, kbf, kwp, kbp = jax.random.split(key, 5)

    x = jax.random.normal(kx, (B, S, H), dtype=jnp.float32)
    # HF Conv1D: weight (in_features, out_features), bias (out_features,)
    w_fc = 0.02 * jax.random.normal(kwf, (H, I), dtype=jnp.float32)
    b_fc = 0.01 * jax.random.normal(kbf, (I,), dtype=jnp.float32)
    w_proj = 0.02 * jax.random.normal(kwp, (I, H), dtype=jnp.float32)
    b_proj = 0.01 * jax.random.normal(kbp, (H,), dtype=jnp.float32)

    ref = gpt2_mlp_ref(x, w_fc, b_fc, w_proj, b_proj)

    # 1) Auto path (small weights -> weight-resident mode), f32.
    out = jax.block_until_ready(gpt2_mlp(x, w_fc, b_fc, w_proj, b_proj))
    assert out.shape == (B, S, H)
    assert jnp.allclose(out, ref, atol=2e-4, rtol=2e-4), "f32 (resident) mismatch"

    # 2) Forced I-tiled path (exercises the accumulator / pl.when logic), f32.
    out_t = jax.block_until_ready(
        gpt2_mlp(x, w_fc, b_fc, w_proj, b_proj, weight_resident=False, ti=256))
    assert out_t.shape == (B, S, H)
    assert jnp.allclose(out_t, ref, atol=2e-4, rtol=2e-4), "f32 (tiled) mismatch"

    # 3) bf16 path (native MXU dtype, no upcast inside the kernel).
    out_bf16 = jax.block_until_ready(
        gpt2_mlp(x.astype(jnp.bfloat16),
                 w_fc.astype(jnp.bfloat16), b_fc.astype(jnp.bfloat16),
                 w_proj.astype(jnp.bfloat16), b_proj.astype(jnp.bfloat16)))
    assert out_bf16.shape == (B, S, H)
    assert jnp.allclose(out_bf16.astype(jnp.float32), ref, atol=5e-2, rtol=5e-2), \
        "bf16 mismatch vs reference"

    # TODO(synk): training-mode dropout (resid_pdrop) not implemented; eval-mode identity.
    print("KERNEL_OK")
</pallas_src>

<mosaic_0001>
module attributes {stable_mosaic.version = 11 : i64} {
  func.func @gpt2_mlp_kernel_resident(%arg0: i32, %arg1: memref<16x128xf32, #tpu.memory_space<vmem>>, %arg2: memref<128x512xf32, #tpu.memory_space<vmem>>, %arg3: memref<1x512xf32, #tpu.memory_space<vmem>>, %arg4: memref<512x128xf32, #tpu.memory_space<vmem>>, %arg5: memref<1x128xf32, #tpu.memory_space<vmem>>, %arg6: memref<16x128xf32, #tpu.memory_space<vmem>>) attributes {dimension_semantics = [#tpu.dimension_semantics<parallel>], iteration_bounds = array<i64: 1>, scalar_prefetch = 0 : i64, scratch_operands = 0 : i64, tpu.core_type = #tpu.core_type<tc>, window_params = [{transform_indices = @transform_0, window_bounds = array<i64: 16, 128>}, {pipeline_mode = #tpu.pipeline_mode<synchronous>, transform_indices = @transform_1, window_bounds = array<i64: 128, 512>}, {pipeline_mode = #tpu.pipeline_mode<synchronous>, transform_indices = @transform_2, window_bounds = array<i64: 1, 512>}, {pipeline_mode = #tpu.pipeline_mode<synchronous>, transform_indices = @transform_3, window_bounds = array<i64: 512, 128>}, {pipeline_mode = #tpu.pipeline_mode<synchronous>, transform_indices = @transform_4, window_bounds = array<i64: 1, 128>}, {transform_indices = @transform_5, window_bounds = array<i64: 16, 128>}]} {
    %c0 = arith.constant 0 : index
    %c0_0 = arith.constant 0 : index
    %0 = vector.load %arg1[%c0, %c0_0] : memref<16x128xf32, #tpu.memory_space<vmem>>, vector<16x128xf32>
    %c0_1 = arith.constant 0 : index
    %c0_2 = arith.constant 0 : index
    %1 = vector.load %arg2[%c0_1, %c0_2] : memref<128x512xf32, #tpu.memory_space<vmem>>, vector<128x512xf32>
    %cst = arith.constant dense<0.000000e+00> : vector<16x512xf32>
    %2 = tpu.matmul %0, %1, %cst {dimension_numbers = #tpu.dot_dimension_numbers<[1], [0], [0], [1], [0, 0, 1, 1], [], []>} : vector<16x128xf32>, vector<128x512xf32>, vector<16x512xf32> -> vector<16x512xf32>
    %c0_3 = arith.constant 0 : index
    %c0_4 = arith.constant 0 : index
    %3 = vector.load %arg3[%c0_3, %c0_4] : memref<1x512xf32, #tpu.memory_space<vmem>>, vector<1x512xf32>
    %4 = vector.broadcast %3 : vector<1x512xf32> to vector<16x512xf32>
    %5 = arith.addf %2, %4 : vector<16x512xf32>
    %cst_5 = arith.constant 5.000000e-01 : f32
    %6 = vector.broadcast %cst_5 : f32 to vector<16x512xf32>
    %7 = arith.mulf %6, %5 : vector<16x512xf32>
    %cst_6 = arith.constant 4.471500e-02 : f32
    %8 = vector.broadcast %cst_6 : f32 to vector<16x512xf32>
    %9 = arith.mulf %8, %5 : vector<16x512xf32>
    %10 = arith.mulf %9, %5 : vector<16x512xf32>
    %11 = arith.mulf %10, %5 : vector<16x512xf32>
    %12 = arith.addf %5, %11 : vector<16x512xf32>
    %cst_7 = arith.constant 0.797884583 : f32
    %13 = vector.broadcast %cst_7 : f32 to vector<16x512xf32>
    %14 = arith.mulf %13, %12 : vector<16x512xf32>
    %15 = math.tanh %14 : vector<16x512xf32>
    %cst_8 = arith.constant 1.000000e+00 : f32
    %16 = vector.broadcast %cst_8 : f32 to vector<16x512xf32>
    %17 = arith.addf %16, %15 : vector<16x512xf32>
    %18 = arith.mulf %7, %17 : vector<16x512xf32>
    %c0_9 = arith.constant 0 : index
    %c0_10 = arith.constant 0 : index
    %19 = vector.load %arg4[%c0_9, %c0_10] : memref<512x128xf32, #tpu.memory_space<vmem>>, vector<512x128xf32>
    %cst_11 = arith.constant dense<0.000000e+00> : vector<16x128xf32>
    %20 = tpu.matmul %18, %19, %cst_11 {dimension_numbers = #tpu.dot_dimension_numbers<[1], [0], [0], [1], [0, 0, 1, 1], [], []>} : vector<16x512xf32>, vector<512x128xf32>, vector<16x128xf32> -> vector<16x128xf32>
    %c0_12 = arith.constant 0 : index
    %c0_13 = arith.constant 0 : index
    %21 = vector.load %arg5[%c0_12, %c0_13] : memref<1x128xf32, #tpu.memory_space<vmem>>, vector<1x128xf32>
    %22 = vector.broadcast %21 : vector<1x128xf32> to vector<16x128xf32>
    %23 = arith.addf %20, %22 : vector<16x128xf32>
    %c0_14 = arith.constant 0 : index
    %c0_15 = arith.constant 0 : index
    %24 = vector.load %arg6[%c0_14, %c0_15] : memref<16x128xf32, #tpu.memory_space<vmem>>, vector<16x128xf32>
    tpu.vector_store %arg6[%c0_14, %c0_15], %23 {strides = array<i32>} : memref<16x128xf32, #tpu.memory_space<vmem>>, vector<16x128xf32>,
    return
  }
  func.func @transform_0(%arg0: i32) -> (i32, i32) {
    %c0_i32 = arith.constant 0 : i32
    %c0_i32_0 = arith.constant 0 : i32
    return %arg0, %c0_i32 : i32, i32
  }
  func.func @transform_1(%arg0: i32) -> (i32, i32) {
    %c0_i32 = arith.constant 0 : i32
    %c0_i32_0 = arith.constant 0 : i32
    %c0_i32_1 = arith.constant 0 : i32
    return %c0_i32, %c0_i32_0 : i32, i32
  }
  func.func @transform_2(%arg0: i32) -> (i32, i32) {
    %c0_i32 = arith.constant 0 : i32
    %c0_i32_0 = arith.constant 0 : i32
    %c0_i32_1 = arith.constant 0 : i32
    return %c0_i32, %c0_i32_0 : i32, i32
  }
  func.func @transform_3(%arg0: i32) -> (i32, i32) {
    %c0_i32 = arith.constant 0 : i32
    %c0_i32_0 = arith.constant 0 : i32
    %c0_i32_1 = arith.constant 0 : i32
    return %c0_i32, %c0_i32_0 : i32, i32
  }
  func.func @transform_4(%arg0: i32) -> (i32, i32) {
    %c0_i32 = arith.constant 0 : i32
    %c0_i32_0 = arith.constant 0 : i32
    %c0_i32_1 = arith.constant 0 : i32
    return %c0_i32, %c0_i32_0 : i32, i32
  }
  func.func @transform_5(%arg0: i32) -> (i32, i32) {
    %c0_i32 = arith.constant 0 : i32
    %c0_i32_0 = arith.constant 0 : i32
    return %arg0, %c0_i32 : i32, i32
  }
}

</mosaic_0001>

<llo_original>
// kernel: tpu_custom_call.1
$region0: #{tpu_custom_call.1}
  #allocation0 [shape = 'u32[]', space=smem, size = 0x4, offset = 0x4, fixed_abs, tag = 'smem constant byte address 0x4 - core index']
  #allocation1 [shape = 'u32[144,128]{1,0:T(1,128)}', space=vmem, size = 0x12000, scoped, tag = 'internal scratch']
  %s0 = inlined_call_operand.hbm [shape: f32[16,128], index: 0, kind: input, shape index: {}]
  %s1 = inlined_call_operand.hbm [shape: f32[128,512], index: 1, kind: input, shape index: {}]
  %s2 = inlined_call_operand.vmem [shape: f32[1,512], index: 2, kind: input, shape index: {}]
  %s3 = inlined_call_operand.hbm [shape: f32[512,128], index: 3, kind: input, shape index: {}]
  %s4 = inlined_call_operand.vmem [shape: f32[1,128], index: 4, kind: input, shape index: {}]
  %s5 = inlined_call_operand.hbm [shape: f32[16,128], index: 5, kind: output, shape index: {}]
  %s6 = sld [smem:[#allocation0]]
  $region42: #{tpu_custom_call.1} parent=0
    _
  %s8 = ssub.s32 1, %s6
  %s9 = scalar_select 0, %s8, %s6
  $region1: #{tpu_custom_call.1} parent=0
    #allocation2 [shape = 'u8[8192]{0}', space=vmem, size = 0x2000, scoped, tag = 'input window, operand 0, single buffered']
    #allocation3 [shape = 's32[1]{0}', space=sflag, size = 0x4, scoped, tag = 'scoped memory for tpu_custom_call.1']
    #allocation4 [shape = 's32[1]{0}', space=sflag, size = 0x4, scoped, tag = 'scoped memory for tpu_custom_call.1']
    #allocation5 [shape = 'u8[262144]{0}', space=vmem, size = 0x40000, scoped, tag = 'input window, operand 1, single buffered']
    #allocation6 [shape = 's32[1]{0}', space=sflag, size = 0x4, scoped, tag = 'scoped memory for tpu_custom_call.1']
    #allocation7 [shape = 'u8[262144]{0}', space=vmem, size = 0x40000, scoped, tag = 'input window, operand 3, single buffered']
    #allocation8 [shape = 'u8[8192]{0}', space=vmem, size = 0x2000, scoped, tag = 'output window, operand 0, single buffered']
    %10 = vsyncpa [#allocation3], 0
    %11 = vsyncpa [#allocation6], 0
    %12 = vsyncpa [#allocation4], 0
    // Predicated region
    $region2: #{tpu_custom_call.1} parent=1 // pred_check
      _
    $region3: #{tpu_custom_call.1} parent=1 // pred_check_branch
      %14 = sbr.rel (0) target = $region5
    $region4: #{tpu_custom_call.1} parent=1 // pred_region
      %s16 = ssub.s32 256, 256
      %17 = vsyncadd [#allocation3], %s16
      %s18 = sshll.u32 [#allocation2], 4
      %s19 = int_to_ptr.vmem [resolvable:$true] %s18
      %24 = dma.hbm_to_vmem [thread:$0]  %s0, 256, %s19, [#allocation3], 128, 128, 8
    $region5: #{tpu_custom_call.1} parent=1 // pred_fallthru
      _
    // Predicated region
    $region6: #{tpu_custom_call.1} parent=1 // pred_check
      _
    $region7: #{tpu_custom_call.1} parent=1 // pred_check_branch
      %26 = sbr.rel (0) target = $region9
    $region8: #{tpu_custom_call.1} parent=1 // pred_region
      %s28 = ssub.s32 8192, 8192
      %29 = vsyncadd [#allocation6], %s28
      %s30 = sshll.u32 [#allocation5], 4
      %s31 = int_to_ptr.vmem [resolvable:$true] %s30
      %36 = dma.hbm_to_vmem [thread:$0]  %s1, 8192, %s31, [#allocation6], 512, 512, 32
    $region9: #{tpu_custom_call.1} parent=1 // pred_fallthru
      _
    // Predicated region
    $region10: #{tpu_custom_call.1} parent=1 // pred_check
      _
    $region11: #{tpu_custom_call.1} parent=1 // pred_check_branch
      %38 = sbr.rel (0) target = $region13
    $region12: #{tpu_custom_call.1} parent=1 // pred_region
      _
    $region13: #{tpu_custom_call.1} parent=1 // pred_fallthru
      _
    // Predicated region
    $region14: #{tpu_custom_call.1} parent=1 // pred_check
      _
    $region15: #{tpu_custom_call.1} parent=1 // pred_check_branch
      %40 = sbr.rel (0) target = $region17
    $region16: #{tpu_custom_call.1} parent=1 // pred_region
      %s42 = ssub.s32 8192, 8192
      %43 = vsyncadd [#allocation6], %s42
      %s44 = sshll.u32 [#allocation7], 4
      %s45 = int_to_ptr.vmem [resolvable:$true] %s44
      %50 = dma.hbm_to_vmem [thread:$0]  %s3, 8192, %s45, [#allocation6], 128, 128, 8
    $region17: #{tpu_custom_call.1} parent=1 // pred_fallthru
      _
    // Predicated region
    $region18: #{tpu_custom_call.1} parent=1 // pred_check
      _
    $region19: #{tpu_custom_call.1} parent=1 // pred_check_branch
      %52 = sbr.rel (0) target = $region21
    $region20: #{tpu_custom_call.1} parent=1 // pred_region
      _
    $region21: #{tpu_custom_call.1} parent=1 // pred_fallthru
      _
    // Predicated region
    $region22: #{tpu_custom_call.1} parent=1 // pred_check
      _
    $region23: #{tpu_custom_call.1} parent=1 // pred_check_branch
      %54 = sbr.rel (0) target = $region25
    $region24: #{tpu_custom_call.1} parent=1 // pred_region
      %55 = dma.done [#allocation3], 256
    $region25: #{tpu_custom_call.1} parent=1 // pred_fallthru
      _
    // Predicated region
    $region26: #{tpu_custom_call.1} parent=1 // pred_check
      _
    $region27: #{tpu_custom_call.1} parent=1 // pred_check_branch
      %57 = sbr.rel (0) target = $region29
    $region28: #{tpu_custom_call.1} parent=1 // pred_region
      %58 = dma.done [#allocation6], 8192
    $region29: #{tpu_custom_call.1} parent=1 // pred_fallthru
      _
    // Predicated region
    $region30: #{tpu_custom_call.1} parent=1 // pred_check
      _
    $region31: #{tpu_custom_call.1} parent=1 // pred_check_branch
      %60 = sbr.rel (0) target = $region33
    $region32: #{tpu_custom_call.1} parent=1 // pred_region
      %61 = dma.done [#allocation6], 8192
    $region33: #{tpu_custom_call.1} parent=1 // pred_fallthru
      _
    %v62 = vld [vmem:[#allocation2] sm:$0xff]
    %v63 = vld [vmem:[#allocation2 + $0x8] sm:$0xff]
    %v64 = vld [vmem:[#allocation5] sm:$0xff]
    %v65 = vld [vmem:[#allocation5 + $0x8] sm:$0xff]
    %v66 = vld [vmem:[#allocation5 + $0x10] sm:$0xff]
    %v67 = vld [vmem:[#allocation5 + $0x18] sm:$0xff]
    %v68 = vld [vmem:[#allocation5 + $0x20] sm:$0xff]
    %v69 = vld [vmem:[#allocation5 + $0x28] sm:$0xff]
    %v70 = vld [vmem:[#allocation5 + $0x30] sm:$0xff]
    %v71 = vld [vmem:[#allocation5 + $0x38] sm:$0xff]
    %v72 = vld [vmem:[#allocation5 + $0x40] sm:$0xff]
    %v73 = vld [vmem:[#allocation5 + $0x48] sm:$0xff]
    %v74 = vld [vmem:[#allocation5 + $0x50] sm:$0xff]
    %v75 = vld [vmem:[#allocation5 + $0x58] sm:$0xff]
    %v76 = vld [vmem:[#allocation5 + $0x60] sm:$0xff]
    %v77 = vld [vmem:[#allocation5 + $0x68] sm:$0xff]
    %v78 = vld [vmem:[#allocation5 + $0x70] sm:$0xff]
    %v79 = vld [vmem:[#allocation5 + $0x78] sm:$0xff]
    %v80 = vld [vmem:[#allocation5 + $0x80] sm:$0xff]
    %v81 = vld [vmem:[#allocation5 + $0x88] sm:$0xff]
    %v82 = vld [vmem:[#allocation5 + $0x90] sm:$0xff]
    %v83 = vld [vmem:[#allocation5 + $0x98] sm:$0xff]
    %v84 = vld [vmem:[#allocation5 + $0xa0] sm:$0xff]
    %v85 = vld [vmem:[#allocation5 + $0xa8] sm:$0xff]
    %v86 = vld [vmem:[#allocation5 + $0xb0] sm:$0xff]
    %v87 = vld [vmem:[#allocation5 + $0xb8] sm:$0xff]
    %v88 = vld [vmem:[#allocation5 + $0xc0] sm:$0xff]
    %v89 = vld [vmem:[#allocation5 + $0xc8] sm:$0xff]
    %v90 = vld [vmem:[#allocation5 + $0xd0] sm:$0xff]
    %v91 = vld [vmem:[#allocation5 + $0xd8] sm:$0xff]
    %v92 = vld [vmem:[#allocation5 + $0xe0] sm:$0xff]
    %v93 = vld [vmem:[#allocation5 + $0xe8] sm:$0xff]
    %v94 = vld [vmem:[#allocation5 + $0xf0] sm:$0xff]
    %v95 = vld [vmem:[#allocation5 + $0xf8] sm:$0xff]
    %v96 = vld [vmem:[#allocation5 + $0x100] sm:$0xff]
    %v97 = vld [vmem:[#allocation5 + $0x108] sm:$0xff]
    %v98 = vld [vmem:[#allocation5 + $0x110] sm:$0xff]
    %v99 = vld [vmem:[#allocation5 + $0x118] sm:$0xff]
    %v100 = vld [vmem:[#allocation5 + $0x120] sm:$0xff]
    %v101 = vld [vmem:[#allocation5 + $0x128] sm:$0xff]
    %v102 = vld [vmem:[#allocation5 + $0x130] sm:$0xff]
    %v103 = vld [vmem:[#allocation5 + $0x138] sm:$0xff]
    %v104 = vld [vmem:[#allocation5 + $0x140] sm:$0xff]
    %v105 = vld [vmem:[#allocation5 + $0x148] sm:$0xff]
    %v106 = vld [vmem:[#allocation5 + $0x150] sm:$0xff]
    %v107 = vld [vmem:[#allocation5 + $0x158] sm:$0xff]
    %v108 = vld [vmem:[#allocation5 + $0x160] sm:$0xff]
    %v109 = vld [vmem:[#allocation5 + $0x168] sm:$0xff]
    %v110 = vld [vmem:[#allocation5 + $0x170] sm:$0xff]
    %v111 = vld [vmem:[#allocation5 + $0x178] sm:$0xff]
    %v112 = vld [vmem:[#allocation5 + $0x180] sm:$0xff]
    %v113 = vld [vmem:[#allocation5 + $0x188] sm:$0xff]
    %v114 = vld [vmem:[#allocation5 + $0x190] sm:$0xff]
    %v115 = vld [vmem:[#allocation5 + $0x198] sm:$0xff]
    %v116 = vld [vmem:[#allocation5 + $0x1a0] sm:$0xff]
    %v117 = vld [vmem:[#allocation5 + $0x1a8] sm:$0xff]
    %v118 = vld [vmem:[#allocation5 + $0x1b0] sm:$0xff]
    %v119 = vld [vmem:[#allocation5 + $0x1b8] sm:$0xff]
    %v120 = vld [vmem:[#allocation5 + $0x1c0] sm:$0xff]
    %v121 = vld [vmem:[#allocation5 + $0x1c8] sm:$0xff]
    %v122 = vld [vmem:[#allocation5 + $0x1d0] sm:$0xff]
    %v123 = vld [vmem:[#allocation5 + $0x1d8] sm:$0xff]
    %v124 = vld [vmem:[#allocation5 + $0x1e0] sm:$0xff]
    %v125 = vld [vmem:[#allocation5 + $0x1e8] sm:$0xff]
    %v126 = vld [vmem:[#allocation5 + $0x1f0] sm:$0xff]
    %v127 = vld [vmem:[#allocation5 + $0x1f8] sm:$0xff]
    %v128 = vld [vmem:[%s2] sm:$0xf]
    %v130 = vlaneseq
    %v131 = vshrl.u32 %v130, 7
    %v132 = vsub.s32 0, %v131
    %v133 = vrot.slane %v128, %v132
    %v134 = vlaneseq
    %v135 = vshrl.u32 %v134, 7
    %v136 = vsub.s32 1, %v135
    %v137 = vrot.slane %v128, %v136
    %v138 = vlaneseq
    %v139 = vshrl.u32 %v138, 7
    %v140 = vsub.s32 2, %v139
    %v141 = vrot.slane %v128, %v140
    %v142 = vlaneseq
    %v143 = vshrl.u32 %v142, 7
    %v144 = vsub.s32 3, %v143
    %v145 = vrot.slane %v128, %v144
    %150 = vmatprep.subr.mxu0 %v65
    %151 = vmatpush1.msra.mxu0 %v64
    %152 = vmatprep.subr.mxu0 %v69
    %153 = vmatpush1.msra.mxu0 %v68
    %154 = vmatprep.subr.mxu0 %v73
    %155 = vmatpush1.msra.mxu0 %v72
    %156 = vmatprep.subr.mxu0 %v77
    %157 = vmatpush1.msra.mxu0 %v76
    %158 = vmatprep.subr.mxu0 %v81
    %159 = vmatpush1.msra.mxu0 %v80
    %160 = vmatprep.subr.mxu0 %v85
    %161 = vmatpush1.msra.mxu0 %v84
    %162 = vmatprep.subr.mxu0 %v89
    %163 = vmatpush1.msra.mxu0 %v88
    %164 = vmatprep.subr.mxu0 %v93
    %165 = vmatpush1.msra.mxu0 %v92
    %166 = vmatprep.subr.mxu0 %v97
    %167 = vmatpush1.msra.mxu0 %v96
    %168 = vmatprep.subr.mxu0 %v101
    %169 = vmatpush1.msra.mxu0 %v100
    %170 = vmatprep.subr.mxu0 %v105
    %171 = vmatpush1.msra.mxu0 %v104
    %172 = vmatprep.subr.mxu0 %v109
    %173 = vmatpush1.msra.mxu0 %v108
    %174 = vmatprep.subr.mxu0 %v113
    %175 = vmatpush1.msra.mxu0 %v112
    %176 = vmatprep.subr.mxu0 %v117
    %177 = vmatpush1.msra.mxu0 %v116
    %178 = vmatprep.subr.mxu0 %v121
    %179 = vmatpush1.msra.mxu0 %v120
    %180 = vmatprep.subr.mxu0 %v125
    %181 = vmatpush1.msra.mxu0 %v124
    %182 = vmatprep.subr.mxu0 0.0
    %183 = vmatpush1.msra.mxu0 0.0
    %184 = vmatprep.subr.mxu0 0.0
    %185 = vmatpush1.msra.mxu0 0.0
    %186 = vmatprep.subr.mxu0 0.0
    %187 = vmatpush1.msra.mxu0 0.0
    %188 = vmatprep.subr.mxu0 0.0
    %189 = vmatpush1.msra.mxu0 0.0
    %190 = vmatprep.subr.mxu0 0.0
    %191 = vmatpush1.msra.mxu0 0.0
    %192 = vmatprep.subr.mxu0 0.0
    %193 = vmatpush1.msra.mxu0 0.0
    %194 = vmatprep.subr.mxu0 0.0
    %195 = vmatpush1.msra.mxu0 0.0
    %196 = vmatprep.subr.mxu0 0.0
    %197 = vmatpush1.msra.mxu0 0.0
    %198 = vmatprep.subr.mxu0 0.0
    %199 = vmatpush1.msra.mxu0 0.0
    %200 = vmatprep.subr.mxu0 0.0
    %201 = vmatpush1.msra.mxu0 0.0
    %202 = vmatprep.subr.mxu0 0.0
    %203 = vmatpush1.msra.mxu0 0.0
    %204 = vmatprep.subr.mxu0 0.0
    %205 = vmatpush1.msra.mxu0 0.0
    %206 = vmatprep.subr.mxu0 0.0
    %207 = vmatpush1.msra.mxu0 0.0
    %208 = vmatprep.subr.mxu0 0.0
    %209 = vmatpush1.msra.mxu0 0.0
    %210 = vmatprep.subr.mxu0 0.0
    %211 = vmatpush1.msra.mxu0 0.0
    %212 = vmatprep.subr.mxu0 0.0
    %213 = vmatpush1.msra.mxu0 0.0
    %214 = vmatprep.mubr.f32.mxu0 0.0
    %215 = vmatmul.mubr.f32.gmra.mrb[0].mxu0 %v62
    %v216 = vpop.f32.mrb[0].mxu0
    %v217 = vadd.f32 %v133, %v216
    %v218 = vpop.f32.mrb[0].mxu0
    %v219 = vadd.f32 %v137, %v218
    %220 = vmatprep.mubr.f32.mxu0 0.0
    %221 = vmatmul.mubr.f32.gmra.mrb[0].mxu0 %v63
    %v222 = vpop.f32.mrb[0].mxu0
    %v223 = vadd.f32 %v133, %v222
    %v224 = vpop.f32.mrb[0].mxu0
    %v225 = vadd.f32 %v137, %v224
    %226 = vdwg.mxu0
    %227 = vmatprep.subr.mxu0 %v67
    %228 = vmatpush1.msra.mxu0 %v66
    %229 = vmatprep.subr.mxu0 %v71
    %230 = vmatpush1.msra.mxu0 %v70
    %231 = vmatprep.subr.mxu0 %v75
    %232 = vmatpush1.msra.mxu0 %v74
    %233 = vmatprep.subr.mxu0 %v79
    %234 = vmatpush1.msra.mxu0 %v78
    %235 = vmatprep.subr.mxu0 %v83
    %236 = vmatpush1.msra.mxu0 %v82
    %237 = vmatprep.subr.mxu0 %v87
    %238 = vmatpush1.msra.mxu0 %v86
    %239 = vmatprep.subr.mxu0 %v91
    %240 = vmatpush1.msra.mxu0 %v90
    %241 = vmatprep.subr.mxu0 %v95
    %242 = vmatpush1.msra.mxu0 %v94
    %243 = vmatprep.subr.mxu0 %v99
    %244 = vmatpush1.msra.mxu0 %v98
    %245 = vmatprep.subr.mxu0 %v103
    %246 = vmatpush1.msra.mxu0 %v102
    %247 = vmatprep.subr.mxu0 %v107
    %248 = vmatpush1.msra.mxu0 %v106
    %249 = vmatprep.subr.mxu0 %v111
    %250 = vmatpush1.msra.mxu0 %v110
    %251 = vmatprep.subr.mxu0 %v115
    %252 = vmatpush1.msra.mxu0 %v114
    %253 = vmatprep.subr.mxu0 %v119
    %254 = vmatpush1.msra.mxu0 %v118
    %255 = vmatprep.subr.mxu0 %v123
    %256 = vmatpush1.msra.mxu0 %v122
    %257 = vmatprep.subr.mxu0 %v127
    %258 = vmatpush1.msra.mxu0 %v126
    %259 = vmatprep.subr.mxu0 0.0
    %260 = vmatpush1.msra.mxu0 0.0
    %261 = vmatprep.subr.mxu0 0.0
    %262 = vmatpush1.msra.mxu0 0.0
    %263 = vmatprep.subr.mxu0 0.0
    %264 = vmatpush1.msra.mxu0 0.0
    %265 = vmatprep.subr.mxu0 0.0
    %266 = vmatpush1.msra.mxu0 0.0
    %267 = vmatprep.subr.mxu0 0.0
    %268 = vmatpush1.msra.mxu0 0.0
    %269 = vmatprep.subr.mxu0 0.0
    %270 = vmatpush1.msra.mxu0 0.0
    %271 = vmatprep.subr.mxu0 0.0
    %272 = vmatpush1.msra.mxu0 0.0
    %273 = vmatprep.subr.mxu0 0.0
    %274 = vmatpush1.msra.mxu0 0.0
    %275 = vmatprep.subr.mxu0 0.0
    %276 = vmatpush1.msra.mxu0 0.0
    %277 = vmatprep.subr.mxu0 0.0
    %278 = vmatpush1.msra.mxu0 0.0
    %279 = vmatprep.subr.mxu0 0.0
    %280 = vmatpush1.msra.mxu0 0.0
    %281 = vmatprep.subr.mxu0 0.0
    %282 = vmatpush1.msra.mxu0 0.0
    %283 = vmatprep.subr.mxu0 0.0
    %284 = vmatpush1.msra.mxu0 0.0
    %285 = vmatprep.subr.mxu0 0.0
    %286 = vmatpush1.msra.mxu0 0.0
    %287 = vmatprep.subr.mxu0 0.0
    %288 = vmatpush1.msra.mxu0 0.0
    %289 = vmatprep.subr.mxu0 0.0
    %290 = vmatpush1.msra.mxu0 0.0
    %291 = vmatprep.mubr.f32.mxu0 0.0
    %292 = vmatmul.mubr.f32.gmra.mrb[0].mxu0 %v62
    %v293 = vpop.f32.mrb[0].mxu0
    %v294 = vadd.f32 %v141, %v293
    %v295 = vpop.f32.mrb[0].mxu0
    %v296 = vadd.f32 %v145, %v295
    %297 = vmatprep.mubr.f32.mxu0 0.0
    %298 = vmatmul.mubr.f32.gmra.mrb[0].mxu0 %v63
    %v299 = vpop.f32.mrb[0].mxu0
    %v300 = vadd.f32 %v141, %v299
    %v301 = vpop.f32.mrb[0].mxu0
    %v302 = vadd.f32 %v145, %v301
    %303 = vdwg.mxu0
    %v304 = vmul.f32 %v217, 0.5
    %v305 = vmul.f32 %v219, 0.5
    %v306 = vmul.f32 %v294, 0.5
    %v307 = vmul.f32 %v296, 0.5
    %v308 = vmul.f32 %v223, 0.5
    %v309 = vmul.f32 %v225, 0.5
    %v310 = vmul.f32 %v300, 0.5
    %v311 = vmul.f32 %v302, 0.5
    %v312 = vmul.f32 %v217, 0.044715
    %v313 = vmul.f32 %v219, 0.044715
    %v314 = vmul.f32 %v294, 0.044715
    %v315 = vmul.f32 %v296, 0.044715
    %v316 = vmul.f32 %v223, 0.044715
    %v317 = vmul.f32 %v225, 0.044715
    %v318 = vmul.f32 %v300, 0.044715
    %v319 = vmul.f32 %v302, 0.044715
    %v320 = vmul.f32 %v312, %v217
    %v321 = vmul.f32 %v313, %v219
    %v322 = vmul.f32 %v314, %v294
    %v323 = vmul.f32 %v315, %v296
    %v324 = vmul.f32 %v316, %v223
    %v325 = vmul.f32 %v317, %v225
    %v326 = vmul.f32 %v318, %v300
    %v327 = vmul.f32 %v319, %v302
    %v328 = vmul.f32 %v320, %v217
    %v329 = vmul.f32 %v321, %v219
    %v330 = vmul.f32 %v322, %v294
    %v331 = vmul.f32 %v323, %v296
    %v332 = vmul.f32 %v324, %v223
    %v333 = vmul.f32 %v325, %v225
    %v334 = vmul.f32 %v326, %v300
    %v335 = vmul.f32 %v327, %v302
    %v336 = vadd.f32 %v217, %v328
    %v337 = vadd.f32 %v219, %v329
    %v338 = vadd.f32 %v294, %v330
    %v339 = vadd.f32 %v296, %v331
    %v340 = vadd.f32 %v223, %v332
    %v341 = vadd.f32 %v225, %v333
    %v342 = vadd.f32 %v300, %v334
    %v343 = vadd.f32 %v302, %v335
    %v344 = vmul.f32 %v336, 0.7978846
    %v345 = vmul.f32 %v337, 0.7978846
    %v346 = vmul.f32 %v338, 0.7978846
    %v347 = vmul.f32 %v339, 0.7978846
    %v348 = vmul.f32 %v340, 0.7978846
    %v349 = vmul.f32 %v341, 0.7978846
    %v350 = vmul.f32 %v342, 0.7978846
    %v351 = vmul.f32 %v343, 0.7978846
    %v352 = vtanh.pop %v344
    %v353 = vtanh.pop %v345
    %v354 = vtanh.pop %v346
    %v355 = vtanh.pop %v347
    %v356 = vtanh.pop %v348
    %v357 = vtanh.pop %v349
    %v358 = vtanh.pop %v350
    %v359 = vtanh.pop %v351
    %v360 = vadd.f32 %v352, 1.0
    %v361 = vadd.f32 %v353, 1.0
    %v362 = vadd.f32 %v354, 1.0
    %v363 = vadd.f32 %v355, 1.0
    %v364 = vadd.f32 %v356, 1.0
    %v365 = vadd.f32 %v357, 1.0
    %v366 = vadd.f32 %v358, 1.0
    %v367 = vadd.f32 %v359, 1.0
    %v368 = vmul.f32 %v304, %v360
    %v369 = vmul.f32 %v305, %v361
    %v370 = vmul.f32 %v306, %v362
    %v371 = vmul.f32 %v307, %v363
    %v372 = vmul.f32 %v308, %v364
    %v373 = vmul.f32 %v309, %v365
    %v374 = vmul.f32 %v310, %v366
    %v375 = vmul.f32 %v311, %v367
    %v376 = vld [vmem:[#allocation7] sm:$0xff]
    %v377 = vld [vmem:[#allocation7 + $0x8] sm:$0xff]
    %v378 = vld [vmem:[#allocation7 + $0x10] sm:$0xff]
    %v379 = vld [vmem:[#allocation7 + $0x18] sm:$0xff]
    %v380 = vld [vmem:[#allocation7 + $0x20] sm:$0xff]
    %v381 = vld [vmem:[#allocation7 + $0x28] sm:$0xff]
    %v382 = vld [vmem:[#allocation7 + $0x30] sm:$0xff]
    %v383 = vld [vmem:[#allocation7 + $0x38] sm:$0xff]
    %v384 = vld [vmem:[#allocation7 + $0x40] sm:$0xff]
    %v385 = vld [vmem:[#allocation7 + $0x48] sm:$0xff]
    %v386 = vld [vmem:[#allocation7 + $0x50] sm:$0xff]
    %v387 = vld [vmem:[#allocation7 + $0x58] sm:$0xff]
    %v388 = vld [vmem:[#allocation7 + $0x60] sm:$0xff]
    %v389 = vld [vmem:[#allocation7 + $0x68] sm:$0xff]
    %v390 = vld [vmem:[#allocation7 + $0x70] sm:$0xff]
    %v391 = vld [vmem:[#allocation7 + $0x78] sm:$0xff]
    %v392 = vld [vmem:[#allocation7 + $0x80] sm:$0xff]
    %v393 = vld [vmem:[#allocation7 + $0x88] sm:$0xff]
    %v394 = vld [vmem:[#allocation7 + $0x90] sm:$0xff]
    %v395 = vld [vmem:[#allocation7 + $0x98] sm:$0xff]
    %v396 = vld [vmem:[#allocation7 + $0xa0] sm:$0xff]
    %v397 = vld [vmem:[#allocation7 + $0xa8] sm:$0xff]
    %v398 = vld [vmem:[#allocation7 + $0xb0] sm:$0xff]
    %v399 = vld [vmem:[#allocation7 + $0xb8] sm:$0xff]
    %v400 = vld [vmem:[#allocation7 + $0xc0] sm:$0xff]
    %v401 = vld [vmem:[#allocation7 + $0xc8] sm:$0xff]
    %v402 = vld [vmem:[#allocation7 + $0xd0] sm:$0xff]
    %v403 = vld [vmem:[#allocation7 + $0xd8] sm:$0xff]
    %v404 = vld [vmem:[#allocation7 + $0xe0] sm:$0xff]
    %v405 = vld [vmem:[#allocation7 + $0xe8] sm:$0xff]
    %v406 = vld [vmem:[#allocation7 + $0xf0] sm:$0xff]
    %v407 = vld [vmem:[#allocation7 + $0xf8] sm:$0xff]
    %v408 = vld [vmem:[#allocation7 + $0x100] sm:$0xff]
    %v409 = vld [vmem:[#allocation7 + $0x108] sm:$0xff]
    %v410 = vld [vmem:[#allocation7 + $0x110] sm:$0xff]
    %v411 = vld [vmem:[#allocation7 + $0x118] sm:$0xff]
    %v412 = vld [vmem:[#allocation7 + $0x120] sm:$0xff]
    %v413 = vld [vmem:[#allocation7 + $0x128] sm:$0xff]
    %v414 = vld [vmem:[#allocation7 + $0x130] sm:$0xff]
    %v415 = vld [vmem:[#allocation7 + $0x138] sm:$0xff]
    %v416 = vld [vmem:[#allocation7 + $0x140] sm:$0xff]
    %v417 = vld [vmem:[#allocation7 + $0x148] sm:$0xff]
    %v418 = vld [vmem:[#allocation7 + $0x150] sm:$0xff]
    %v419 = vld [vmem:[#allocation7 + $0x158] sm:$0xff]
    %v420 = vld [vmem:[#allocation7 + $0x160] sm:$0xff]
    %v421 = vld [vmem:[#allocation7 + $0x168] sm:$0xff]
    %v422 = vld [vmem:[#allocation7 + $0x170] sm:$0xff]
    %v423 = vld [vmem:[#allocation7 + $0x178] sm:$0xff]
    %v424 = vld [vmem:[#allocation7 + $0x180] sm:$0xff]
    %v425 = vld [vmem:[#allocation7 + $0x188] sm:$0xff]
    %v426 = vld [vmem:[#allocation7 + $0x190] sm:$0xff]
    %v427 = vld [vmem:[#allocation7 + $0x198] sm:$0xff]
    %v428 = vld [vmem:[#allocation7 + $0x1a0] sm:$0xff]
    %v429 = vld [vmem:[#allocation7 + $0x1a8] sm:$0xff]
    %v430 = vld [vmem:[#allocation7 + $0x1b0] sm:$0xff]
    %v431 = vld [vmem:[#allocation7 + $0x1b8] sm:$0xff]
    %v432 = vld [vmem:[#allocation7 + $0x1c0] sm:$0xff]
    %v433 = vld [vmem:[#allocation7 + $0x1c8] sm:$0xff]
    %v434 = vld [vmem:[#allocation7 + $0x1d0] sm:$0xff]
    %v435 = vld [vmem:[#allocation7 + $0x1d8] sm:$0xff]
    %v436 = vld [vmem:[#allocation7 + $0x1e0] sm:$0xff]
    %v437 = vld [vmem:[#allocation7 + $0x1e8] sm:$0xff]
    %v438 = vld [vmem:[#allocation7 + $0x1f0] sm:$0xff]
    %v439 = vld [vmem:[#allocation7 + $0x1f8] sm:$0xff]
    %v440 = vld [vmem:[%s4] sm:$0x1]
    %v442 = vlaneseq
    %v443 = vshrl.u32 %v442, 7
    %v444 = vsub.s32 0, %v443
    %v445 = vrot.slane %v440, %v444
    %447 = vmatprep.subr.mxu0 0.0
    %448 = vmatpush1.msra.mxu0 %v376
    %449 = vmatprep.subr.mxu0 0.0
    %450 = vmatpush1.msra.mxu0 %v377
    %451 = vmatprep.subr.mxu0 0.0
    %452 = vmatpush1.msra.mxu0 %v378
    %453 = vmatprep.subr.mxu0 0.0
    %454 = vmatpush1.msra.mxu0 %v379
    %455 = vmatprep.subr.mxu0 0.0
    %456 = vmatpush1.msra.mxu0 %v380
    %457 = vmatprep.subr.mxu0 0.0
    %458 = vmatpush1.msra.mxu0 %v381
    %459 = vmatprep.subr.mxu0 0.0
    %460 = vmatpush1.msra.mxu0 %v382
    %461 = vmatprep.subr.mxu0 0.0
    %462 = vmatpush1.msra.mxu0 %v383
    %463 = vmatprep.subr.mxu0 0.0
    %464 = vmatpush1.msra.mxu0 %v384
    %465 = vmatprep.subr.mxu0 0.0
    %466 = vmatpush1.msra.mxu0 %v385
    %467 = vmatprep.subr.mxu0 0.0
    %468 = vmatpush1.msra.mxu0 %v386
    %469 = vmatprep.subr.mxu0 0.0
    %470 = vmatpush1.msra.mxu0 %v387
    %471 = vmatprep.subr.mxu0 0.0
    %472 = vmatpush1.msra.mxu0 %v388
    %473 = vmatprep.subr.mxu0 0.0
    %474 = vmatpush1.msra.mxu0 %v389
    %475 = vmatprep.subr.mxu0 0.0
    %476 = vmatpush1.msra.mxu0 %v390
    %477 = vmatprep.subr.mxu0 0.0
    %478 = vmatpush1.msra.mxu0 %v391
    %479 = vmatprep.subr.mxu0 0.0
    %480 = vmatpush1.msra.mxu0 %v392
    %481 = vmatprep.subr.mxu0 0.0
    %482 = vmatpush1.msra.mxu0 %v393
    %483 = vmatprep.subr.mxu0 0.0
    %484 = vmatpush1.msra.mxu0 %v394
    %485 = vmatprep.subr.mxu0 0.0
    %486 = vmatpush1.msra.mxu0 %v395
    %487 = vmatprep.subr.mxu0 0.0
    %488 = vmatpush1.msra.mxu0 %v396
    %489 = vmatprep.subr.mxu0 0.0
    %490 = vmatpush1.msra.mxu0 %v397
    %491 = vmatprep.subr.mxu0 0.0
    %492 = vmatpush1.msra.mxu0 %v398
    %493 = vmatprep.subr.mxu0 0.0
    %494 = vmatpush1.msra.mxu0 %v399
    %495 = vmatprep.subr.mxu0 0.0
    %496 = vmatpush1.msra.mxu0 %v400
    %497 = vmatprep.subr.mxu0 0.0
    %498 = vmatpush1.msra.mxu0 %v401
    %499 = vmatprep.subr.mxu0 0.0
    %500 = vmatpush1.msra.mxu0 %v402
    %501 = vmatprep.subr.mxu0 0.0
    %502 = vmatpush1.msra.mxu0 %v403
    %503 = vmatprep.subr.mxu0 0.0
    %504 = vmatpush1.msra.mxu0 %v404
    %505 = vmatprep.subr.mxu0 0.0
    %506 = vmatpush1.msra.mxu0 %v405
    %507 = vmatprep.subr.mxu0 0.0
    %508 = vmatpush1.msra.mxu0 %v406
    %509 = vmatprep.subr.mxu0 0.0
    %510 = vmatpush1.msra.mxu0 %v407
    %511 = vmatprep.mubr.f32.mxu0 %v369
    %512 = vmatmul.mubr.f32.gmra.mrb[0].mxu0 %v368
    %v513 = vpop.f32.mrb[0].mxu0
    %v514 = vadd.f32 %v445, %v513
    %v515 = vpop.f32.mrb[0].mxu0
    %516 = vmatprep.mubr.f32.mxu0 %v373
    %517 = vmatmul.mubr.f32.gmra.mrb[0].mxu0 %v372
    %v518 = vpop.f32.mrb[0].mxu0
    %v519 = vadd.f32 %v445, %v518
    %v520 = vpop.f32.mrb[0].mxu0
    %521 = vdwg.mxu0
    %522 = vmatprep.subr.mxu0 0.0
    %523 = vmatpush1.msra.mxu0 %v408
    %524 = vmatprep.subr.mxu0 0.0
    %525 = vmatpush1.msra.mxu0 %v409
    %526 = vmatprep.subr.mxu0 0.0
    %527 = vmatpush1.msra.mxu0 %v410
    %528 = vmatprep.subr.mxu0 0.0
    %529 = vmatpush1.msra.mxu0 %v411
    %530 = vmatprep.subr.mxu0 0.0
    %531 = vmatpush1.msra.mxu0 %v412
    %532 = vmatprep.subr.mxu0 0.0
    %533 = vmatpush1.msra.mxu0 %v413
    %534 = vmatprep.subr.mxu0 0.0
    %535 = vmatpush1.msra.mxu0 %v414
    %536 = vmatprep.subr.mxu0 0.0
    %537 = vmatpush1.msra.mxu0 %v415
    %538 = vmatprep.subr.mxu0 0.0
    %539 = vmatpush1.msra.mxu0 %v416
    %540 = vmatprep.subr.mxu0 0.0
    %541 = vmatpush1.msra.mxu0 %v417
    %542 = vmatprep.subr.mxu0 0.0
    %543 = vmatpush1.msra.mxu0 %v418
    %544 = vmatprep.subr.mxu0 0.0
    %545 = vmatpush1.msra.mxu0 %v419
    %546 = vmatprep.subr.mxu0 0.0
    %547 = vmatpush1.msra.mxu0 %v420
    %548 = vmatprep.subr.mxu0 0.0
    %549 = vmatpush1.msra.mxu0 %v421
    %550 = vmatprep.subr.mxu0 0.0
    %551 = vmatpush1.msra.mxu0 %v422
    %552 = vmatprep.subr.mxu0 0.0
    %553 = vmatpush1.msra.mxu0 %v423
    %554 = vmatprep.subr.mxu0 0.0
    %555 = vmatpush1.msra.mxu0 %v424
    %556 = vmatprep.subr.mxu0 0.0
    %557 = vmatpush1.msra.mxu0 %v425
    %558 = vmatprep.subr.mxu0 0.0
    %559 = vmatpush1.msra.mxu0 %v426
    %560 = vmatprep.subr.mxu0 0.0
    %561 = vmatpush1.msra.mxu0 %v427
    %562 = vmatprep.subr.mxu0 0.0
    %563 = vmatpush1.msra.mxu0 %v428
    %564 = vmatprep.subr.mxu0 0.0
    %565 = vmatpush1.msra.mxu0 %v429
    %566 = vmatprep.subr.mxu0 0.0
    %567 = vmatpush1.msra.mxu0 %v430
    %568 = vmatprep.subr.mxu0 0.0
    %569 = vmatpush1.msra.mxu0 %v431
    %570 = vmatprep.subr.mxu0 0.0
    %571 = vmatpush1.msra.mxu0 %v432
    %572 = vmatprep.subr.mxu0 0.0
    %573 = vmatpush1.msra.mxu0 %v433
    %574 = vmatprep.subr.mxu0 0.0
    %575 = vmatpush1.msra.mxu0 %v434
    %576 = vmatprep.subr.mxu0 0.0
    %577 = vmatpush1.msra.mxu0 %v435
    %578 = vmatprep.subr.mxu0 0.0
    %579 = vmatpush1.msra.mxu0 %v436
    %580 = vmatprep.subr.mxu0 0.0
    %581 = vmatpush1.msra.mxu0 %v437
    %582 = vmatprep.subr.mxu0 0.0
    %583 = vmatpush1.msra.mxu0 %v438
    %584 = vmatprep.subr.mxu0 0.0
    %585 = vmatpush1.msra.mxu0 %v439
    %586 = vmatprep.mubr.f32.mxu0 %v371
    %587 = vmatmul.mubr.f32.gmra.mrb[0].mxu0 %v370
    %v588 = vpop.f32.mrb[0].mxu0
    %v589 = vadd.f32 %v514, %v588
    %v590 = vpop.f32.mrb[0].mxu0
    %591 = vmatprep.mubr.f32.mxu0 %v375
    %592 = vmatmul.mubr.f32.gmra.mrb[0].mxu0 %v374
    %v593 = vpop.f32.mrb[0].mxu0
    %v594 = vadd.f32 %v519, %v593
    %v595 = vpop.f32.mrb[0].mxu0
    %596 = vdwg.mxu0
    %597 = vst [vmem:[#allocation8] sm:$0xff] %v589
    %598 = vst [vmem:[#allocation8 + $0x8] sm:$0xff] %v594
    // Predicated region
    $region34: #{tpu_custom_call.1} parent=1 // pred_check
      _
    $region35: #{tpu_custom_call.1} parent=1 // pred_check_branch
      %600 = sbr.rel (0) target = $region37
    $region36: #{tpu_custom_call.1} parent=1 // pred_region
      %s602 = ssub.s32 256, 256
      %603 = vsyncadd [#allocation4], %s602
      %s604 = sshll.u32 [#allocation8], 4
      %s605 = int_to_ptr.vmem [resolvable:$true] %s604
      %610 = dma.vmem_to_hbm [thread:$0]  %s605, 256, %s5, [#allocation4], 128, 128, 8
    $region37: #{tpu_custom_call.1} parent=1 // pred_fallthru
      _
    // Predicated region
    $region38: #{tpu_custom_call.1} parent=1 // pred_check
      _
    $region39: #{tpu_custom_call.1} parent=1 // pred_check_branch
      %612 = sbr.rel (0) target = $region41
    $region40: #{tpu_custom_call.1} parent=1 // pred_region
      %613 = dma.done [#allocation4], 256
    $region41: #{tpu_custom_call.1} parent=1 // pred_fallthru
      _
    %614 = vsyncpa [#allocation3], 1
    %615 = vsyncpa [#allocation6], 1
    %616 = vsyncpa [#allocation4], 1

</llo_original>
